<compile_context>
chip_gen: v7x
topology: tpu7x:2x2x1
jax: 0.10.0
libtpu: 0.0.40
codegen_flags: <defaults>
</compile_context>

<pallas_src>
import jax
import jax.numpy as jnp
from jax.experimental import pallas as pl
from jax.experimental.pallas import tpu as pltpu

_LANE = 128
_SUB32 = 8


def _hsigmoid_kernel(x_ref, o_ref):
    x = x_ref[...]
    # relu6(x + 3) * (1/6): pure VPU elementwise work in the tile's native
    # dtype (bf16 stays bf16 end-to-end).
    y = jnp.minimum(jnp.maximum(x + 3.0, 0.0), 6.0) * (1.0 / 6.0)
    o_ref[...] = y.astype(o_ref.dtype)


def _cdiv(a, b):
    return -(-a // b)


def _target_block_bytes():
    """Per-operand block-size target, per TPU generation."""
    try:
        kind = jax.devices()[0].device_kind.lower()
    except Exception:
        kind = ""
    if "v6" in kind:
        # v6e: 32 MiB default scoped VMEM -> 4 MiB blocks (16 MiB
        # double-buffered in+out footprint), ~86% of HBM roofline.
        return 4 * 1024 * 1024
    # v5e (16 MiB default scoped VMEM) and v7x (64 MiB physical VMEM; its
    # 3.2 TB/s HBM hits roofline with small tiles anyway): 2 MiB blocks
    # (8 MiB double-buffered footprint).
    return 2 * 1024 * 1024


def hsigmoid(x):
    """Elementwise hard-sigmoid: relu6(x + 3) / 6, for any float-dtype shape."""
    orig_shape = x.shape
    dtype = x.dtype
    itemsize = jnp.dtype(dtype).itemsize

    if x.size == 0:
        return x

    target_bytes = _target_block_bytes()
    sub = max(_SUB32, 32 // itemsize)  # sublane granularity for this dtype

    trailing_pad = 0
    if x.ndim >= 2:
        rows, cols = orig_shape[-2], orig_shape[-1]
        lead = 1
        for d in orig_shape[:-2]:
            lead *= d
        # Merging leading dims only: the trailing (rows, cols) pair that
        # defines the (8,128) tiling is untouched, so this reshape is a free
        # bitcast (no HBM relayout copy outside the kernel).
        x3 = x.reshape(lead, rows, cols)
    else:
        # 0-D / 1-D: view as (1, 1, n).  Pad to a lane multiple only when the
        # vector is too large for a single block (rare; one small extra copy).
        n = x.size
        lead, rows = 1, 1
        if n % _LANE != 0 and n * itemsize > target_bytes:
            trailing_pad = (-n) % _LANE
        cols = n + trailing_pad
        x3 = x.reshape(1, 1, n)
        if trailing_pad:
            x3 = jnp.pad(x3, ((0, 0), (0, 0), (0, trailing_pad)))

    # ---- column (lane) tile: full extent, or a multiple of 128 dividing cols.
    if cols % _LANE == 0:
        max_ct = max(_LANE, (target_bytes // (sub * itemsize)) // _LANE * _LANE)
        if cols <= max_ct:
            col_tile = cols
        else:
            col_tile = _LANE
            t = 2 * _LANE
            while t <= max_ct:
                if cols % t == 0:  # prefer an even divisor (no masked stores)
                    col_tile = t
                t += _LANE
    else:
        col_tile = cols  # full extent is always a legal block dim

    # ---- row (sublane) tile: full extent, or a multiple of `sub`.
    max_rt = max(sub, (target_bytes // (col_tile * itemsize)) // sub * sub)
    if rows <= max_rt:
        row_tile = rows
    else:
        row_tile = max_rt
        t = max_rt
        while t >= sub:  # prefer a multiple of `sub` that divides rows evenly
            if rows % t == 0:
                row_tile = t
                break
            t -= sub

    # ---- leading tile: batch small (rows, cols) slabs into one block.
    if row_tile < rows or col_tile < cols:
        lead_tile = 1
    else:
        lead_tile = min(lead, max(1, target_bytes // (row_tile * col_tile * itemsize)))
        if lead_tile < lead and lead % lead_tile != 0:
            for t in range(lead_tile, max(0, lead_tile - 64), -1):
                if lead % t == 0:  # avoid a ragged last block when cheap
                    lead_tile = t
                    break

    # ---- ensure >= 4 grid steps on non-tiny inputs so the first input DMA /
    # last output DMA are mostly hidden and each of v7x's two TensorCores gets
    # >= 2 steps.  Tiny tensors stay in a single block (per-step overhead).
    min_steps = 4
    if lead * rows * cols * itemsize >= min_steps * 64 * 1024:
        while (_cdiv(lead, lead_tile) * _cdiv(rows, row_tile)
               * _cdiv(cols, col_tile)) < min_steps:
            if lead_tile > 1:
                lead_tile = max(1, lead_tile // 2)
                continue
            if row_tile > sub:
                new_rt = max(sub, (row_tile // 2) // sub * sub)
                if new_rt < row_tile:
                    row_tile = new_rt
                    continue
            if cols % _LANE == 0 and col_tile > _LANE:
                new_ct = max(_LANE, (col_tile // 2) // _LANE * _LANE)
                if new_ct < col_tile:
                    col_tile = new_ct
                    continue
            break

    grid = (_cdiv(lead, lead_tile), _cdiv(rows, row_tile), _cdiv(cols, col_tile))
    block = (lead_tile, row_tile, col_tile)

    out3 = pl.pallas_call(
        _hsigmoid_kernel,
        out_shape=jax.ShapeDtypeStruct((lead, rows, cols), dtype),
        grid_spec=pltpu.PrefetchScalarGridSpec(
            num_scalar_prefetch=0,
            grid=grid,
            in_specs=[pl.BlockSpec(block, lambda l, r, c: (l, r, c))],
            out_specs=pl.BlockSpec(block, lambda l, r, c: (l, r, c)),
        ),
        compiler_params=pltpu.CompilerParams(
            # Elementwise: every grid axis is independent.  "parallel" lets the
            # runtime shard steps across both TensorCores on 2-TC chips (v7x);
            # it is a no-op on single-TC v5e/v6e.
            dimension_semantics=("parallel", "parallel", "parallel"),
        ),
        cost_estimate=pl.CostEstimate(
            flops=4 * lead * rows * cols,
            transcendentals=0,
            bytes_accessed=2 * lead * rows * cols * itemsize,
        ),
    )(x3)

    if x.ndim >= 2:
        return out3.reshape(orig_shape)  # splitting leading dims back: free
    out_flat = out3.reshape(-1)
    if trailing_pad:
        out_flat = out_flat[: x.size]
    return out_flat.reshape(orig_shape)


def _hsigmoid_ref(x):
    return jnp.clip(x + 3.0, 0.0, 6.0) / 6.0


if __name__ == "__main__":
    key = jax.random.PRNGKey(0)
    k1, k2, k3 = jax.random.split(key, 3)

    # 1) NCHW f32 input matching the PyTorch module (batch=2, channels=4, 16x16).
    #    Non-128-aligned trailing dims -> full-extent trailing block dims,
    #    leading dims merged (no relayout, no pad).
    x = jax.random.normal(k1, (2, 4, 16, 16), dtype=jnp.float32) * 4.0
    y = jax.block_until_ready(hsigmoid(x))
    assert y.shape == x.shape and y.dtype == x.dtype
    assert jnp.allclose(y, _hsigmoid_ref(x), atol=1e-5, rtol=1e-5)

    # 2) 128-aligned last dim exercises the lane-dense path.
    x2 = jax.random.normal(k2, (2, 8, 256), dtype=jnp.float32) * 4.0
    y2 = jax.block_until_ready(hsigmoid(x2))
    assert y2.shape == x2.shape and y2.dtype == x2.dtype
    assert jnp.allclose(y2, _hsigmoid_ref(x2), atol=1e-5, rtol=1e-5)

    # 3) bf16 with odd (misaligned) shape: native-dtype compute end-to-end.
    x3 = (jax.random.normal(k3, (3, 5, 7)) * 4.0).astype(jnp.bfloat16)
    y3 = jax.block_until_ready(hsigmoid(x3))
    assert y3.shape == x3.shape and y3.dtype == x3.dtype
    assert jnp.allclose(y3.astype(jnp.float32),
                        _hsigmoid_ref(x3).astype(jnp.float32),
                        atol=2e-2, rtol=2e-2)

    print("KERNEL_OK")
</pallas_src>

<mosaic_0001>
module attributes {stable_mosaic.version = 11 : i64} {
  func.func @_hsigmoid_kernel(%arg0: i32, %arg1: i32, %arg2: i32, %arg3: memref<8x16x16xf32, #tpu.memory_space<vmem>>, %arg4: memref<8x16x16xf32, #tpu.memory_space<vmem>>) attributes {dimension_semantics = [#tpu.dimension_semantics<parallel>, #tpu.dimension_semantics<parallel>, #tpu.dimension_semantics<parallel>], iteration_bounds = array<i64: 1, 1, 1>, scalar_prefetch = 0 : i64, scratch_operands = 0 : i64, tpu.core_type = #tpu.core_type<tc>, window_params = [{transform_indices = @transform_0, window_bounds = array<i64: 8, 16, 16>}, {transform_indices = @transform_1, window_bounds = array<i64: 8, 16, 16>}]} {
    %c0 = arith.constant 0 : index
    %c0_0 = arith.constant 0 : index
    %c0_1 = arith.constant 0 : index
    %0 = vector.load %arg3[%c0, %c0_0, %c0_1] : memref<8x16x16xf32, #tpu.memory_space<vmem>>, vector<8x16x16xf32>
    %cst = arith.constant 3.000000e+00 : f32
    %1 = vector.broadcast %cst : f32 to vector<8x16x16xf32>
    %2 = arith.addf %0, %1 : vector<8x16x16xf32>
    %cst_2 = arith.constant 0.000000e+00 : f32
    %3 = vector.broadcast %cst_2 : f32 to vector<8x16x16xf32>
    %4 = arith.maximumf %2, %3 : vector<8x16x16xf32>
    %cst_3 = arith.constant 6.000000e+00 : f32
    %5 = vector.broadcast %cst_3 : f32 to vector<8x16x16xf32>
    %6 = arith.minimumf %4, %5 : vector<8x16x16xf32>
    %cst_4 = arith.constant 0.166666672 : f32
    %7 = vector.broadcast %cst_4 : f32 to vector<8x16x16xf32>
    %8 = arith.mulf %6, %7 : vector<8x16x16xf32>
    %c0_5 = arith.constant 0 : index
    %c0_6 = arith.constant 0 : index
    %c0_7 = arith.constant 0 : index
    %9 = vector.load %arg4[%c0_5, %c0_6, %c0_7] : memref<8x16x16xf32, #tpu.memory_space<vmem>>, vector<8x16x16xf32>
    tpu.vector_store %arg4[%c0_5, %c0_6, %c0_7], %8 {strides = array<i32>} : memref<8x16x16xf32, #tpu.memory_space<vmem>>, vector<8x16x16xf32>,
    return
  }
  func.func @transform_0(%arg0: i32, %arg1: i32, %arg2: i32) -> (i32, i32, i32) {
    %c0_i32 = arith.constant 0 : i32
    return %arg0, %arg1, %arg2 : i32, i32, i32
  }
  func.func @transform_1(%arg0: i32, %arg1: i32, %arg2: i32) -> (i32, i32, i32) {
    %c0_i32 = arith.constant 0 : i32
    return %arg0, %arg1, %arg2 : i32, i32, i32
  }
}

</mosaic_0001>

<llo_original>
// kernel: tpu_custom_call.1
$region0: #{tpu_custom_call.1}
  #allocation0 [shape = 'u32[]', space=smem, size = 0x4, offset = 0x4, fixed_abs, tag = 'smem constant byte address 0x4 - core index']
  #allocation1 [shape = 'u32[144,128]{1,0:T(1,128)}', space=vmem, size = 0x12000, scoped, tag = 'internal scratch']
  %s0 = inlined_call_operand.hbm [shape: f32[8,16,16], index: 0, kind: input, shape index: {}]
  %s1 = inlined_call_operand.hbm [shape: f32[8,16,16], index: 1, kind: output, shape index: {}]
  %s2 = sld [smem:[#allocation0]]
  $region18: #{tpu_custom_call.1} parent=0
    _
  %s4 = ssub.s32 1, %s2
  %s5 = scalar_select 0, %s4, %s2
  $region1: #{tpu_custom_call.1} parent=0
    #allocation2 [shape = 'u8[65536]{0}', space=vmem, size = 0x10000, scoped, tag = 'input window, operand 0, single buffered']
    #allocation3 [shape = 's32[1]{0}', space=sflag, size = 0x4, scoped, tag = 'scoped memory for tpu_custom_call.1']
    #allocation4 [shape = 's32[1]{0}', space=sflag, size = 0x4, scoped, tag = 'scoped memory for tpu_custom_call.1']
    #allocation5 [shape = 'u8[65536]{0}', space=vmem, size = 0x10000, scoped, tag = 'output window, operand 0, single buffered']
    %6 = vsyncpa [#allocation3], 0
    %7 = vsyncpa [#allocation4], 0
    // Predicated region
    $region2: #{tpu_custom_call.1} parent=1 // pred_check
      _
    $region3: #{tpu_custom_call.1} parent=1 // pred_check_branch
      %9 = sbr.rel (0) target = $region5
    $region4: #{tpu_custom_call.1} parent=1 // pred_region
      %s11 = ssub.s32 2048, 2048
      %12 = vsyncadd [#allocation3], %s11
      %s13 = sshll.u32 [#allocation2], 4
      %s14 = int_to_ptr.vmem [resolvable:$true] %s13
      %19 = dma.hbm_to_vmem [thread:$0]  %s0, 2048, %s14, [#allocation3], 128, 128, 8
    $region5: #{tpu_custom_call.1} parent=1 // pred_fallthru
      _
    // Predicated region
    $region6: #{tpu_custom_call.1} parent=1 // pred_check
      _
    $region7: #{tpu_custom_call.1} parent=1 // pred_check_branch
      %21 = sbr.rel (0) target = $region9
    $region8: #{tpu_custom_call.1} parent=1 // pred_region
      %22 = dma.done [#allocation3], 2048
    $region9: #{tpu_custom_call.1} parent=1 // pred_fallthru
      _
    %v23 = vld [vmem:[#allocation2] sm:$0xff]
    %v24 = vld [vmem:[#allocation2 + $0x8] sm:$0xff]
    %v25 = vld [vmem:[#allocation2 + $0x10] sm:$0xff]
    %v26 = vld [vmem:[#allocation2 + $0x18] sm:$0xff]
    %v27 = vld [vmem:[#allocation2 + $0x20] sm:$0xff]
    %v28 = vld [vmem:[#allocation2 + $0x28] sm:$0xff]
    %v29 = vld [vmem:[#allocation2 + $0x30] sm:$0xff]
    %v30 = vld [vmem:[#allocation2 + $0x38] sm:$0xff]
    %v31 = vld [vmem:[#allocation2 + $0x40] sm:$0xff]
    %v32 = vld [vmem:[#allocation2 + $0x48] sm:$0xff]
    %v33 = vld [vmem:[#allocation2 + $0x50] sm:$0xff]
    %v34 = vld [vmem:[#allocation2 + $0x58] sm:$0xff]
    %v35 = vld [vmem:[#allocation2 + $0x60] sm:$0xff]
    %v36 = vld [vmem:[#allocation2 + $0x68] sm:$0xff]
    %v37 = vld [vmem:[#allocation2 + $0x70] sm:$0xff]
    %v38 = vld [vmem:[#allocation2 + $0x78] sm:$0xff]
    %v39 = vadd.f32 %v23, 3.0
    %v40 = vadd.f32 %v24, 3.0
    %v41 = vadd.f32 %v25, 3.0
    %v42 = vadd.f32 %v26, 3.0
    %v43 = vadd.f32 %v27, 3.0
    %v44 = vadd.f32 %v28, 3.0
    %v45 = vadd.f32 %v29, 3.0
    %v46 = vadd.f32 %v30, 3.0
    %v47 = vadd.f32 %v31, 3.0
    %v48 = vadd.f32 %v32, 3.0
    %v49 = vadd.f32 %v33, 3.0
    %v50 = vadd.f32 %v34, 3.0
    %v51 = vadd.f32 %v35, 3.0
    %v52 = vadd.f32 %v36, 3.0
    %v53 = vadd.f32 %v37, 3.0
    %v54 = vadd.f32 %v38, 3.0
    %v55 = vmax.f32 %v39, 0.0
    %v56 = vmax.f32 %v40, 0.0
    %v57 = vmax.f32 %v41, 0.0
    %v58 = vmax.f32 %v42, 0.0
    %v59 = vmax.f32 %v43, 0.0
    %v60 = vmax.f32 %v44, 0.0
    %v61 = vmax.f32 %v45, 0.0
    %v62 = vmax.f32 %v46, 0.0
    %v63 = vmax.f32 %v47, 0.0
    %v64 = vmax.f32 %v48, 0.0
    %v65 = vmax.f32 %v49, 0.0
    %v66 = vmax.f32 %v50, 0.0
    %v67 = vmax.f32 %v51, 0.0
    %v68 = vmax.f32 %v52, 0.0
    %v69 = vmax.f32 %v53, 0.0
    %v70 = vmax.f32 %v54, 0.0
    %v71 = vmin.f32 %v55, 6.0
    %v72 = vmin.f32 %v56, 6.0
    %v73 = vmin.f32 %v57, 6.0
    %v74 = vmin.f32 %v58, 6.0
    %v75 = vmin.f32 %v59, 6.0
    %v76 = vmin.f32 %v60, 6.0
    %v77 = vmin.f32 %v61, 6.0
    %v78 = vmin.f32 %v62, 6.0
    %v79 = vmin.f32 %v63, 6.0
    %v80 = vmin.f32 %v64, 6.0
    %v81 = vmin.f32 %v65, 6.0
    %v82 = vmin.f32 %v66, 6.0
    %v83 = vmin.f32 %v67, 6.0
    %v84 = vmin.f32 %v68, 6.0
    %v85 = vmin.f32 %v69, 6.0
    %v86 = vmin.f32 %v70, 6.0
    %v87 = vmul.f32 %v71, 0.16666667
    %v88 = vmul.f32 %v72, 0.16666667
    %v89 = vmul.f32 %v73, 0.16666667
    %v90 = vmul.f32 %v74, 0.16666667
    %v91 = vmul.f32 %v75, 0.16666667
    %v92 = vmul.f32 %v76, 0.16666667
    %v93 = vmul.f32 %v77, 0.16666667
    %v94 = vmul.f32 %v78, 0.16666667
    %v95 = vmul.f32 %v79, 0.16666667
    %v96 = vmul.f32 %v80, 0.16666667
    %v97 = vmul.f32 %v81, 0.16666667
    %v98 = vmul.f32 %v82, 0.16666667
    %v99 = vmul.f32 %v83, 0.16666667
    %v100 = vmul.f32 %v84, 0.16666667
    %v101 = vmul.f32 %v85, 0.16666667
    %v102 = vmul.f32 %v86, 0.16666667
    %vm103 = vcmask 130048
    %104 = vst.msk [vmem:[#allocation5] sm:$0xff] %vm103, %v87
    %105 = vst.msk [vmem:[#allocation5 + $0x8] sm:$0xff] %vm103, %v88
    %106 = vst.msk [vmem:[#allocation5 + $0x10] sm:$0xff] %vm103, %v89
    %107 = vst.msk [vmem:[#allocation5 + $0x18] sm:$0xff] %vm103, %v90
    %108 = vst.msk [vmem:[#allocation5 + $0x20] sm:$0xff] %vm103, %v91
    %109 = vst.msk [vmem:[#allocation5 + $0x28] sm:$0xff] %vm103, %v92
    %110 = vst.msk [vmem:[#allocation5 + $0x30] sm:$0xff] %vm103, %v93
    %111 = vst.msk [vmem:[#allocation5 + $0x38] sm:$0xff] %vm103, %v94
    %112 = vst.msk [vmem:[#allocation5 + $0x40] sm:$0xff] %vm103, %v95
    %113 = vst.msk [vmem:[#allocation5 + $0x48] sm:$0xff] %vm103, %v96
    %114 = vst.msk [vmem:[#allocation5 + $0x50] sm:$0xff] %vm103, %v97
    %115 = vst.msk [vmem:[#allocation5 + $0x58] sm:$0xff] %vm103, %v98
    %116 = vst.msk [vmem:[#allocation5 + $0x60] sm:$0xff] %vm103, %v99
    %117 = vst.msk [vmem:[#allocation5 + $0x68] sm:$0xff] %vm103, %v100
    %118 = vst.msk [vmem:[#allocation5 + $0x70] sm:$0xff] %vm103, %v101
    %119 = vst.msk [vmem:[#allocation5 + $0x78] sm:$0xff] %vm103, %v102
    // Predicated region
    $region10: #{tpu_custom_call.1} parent=1 // pred_check
      _
    $region11: #{tpu_custom_call.1} parent=1 // pred_check_branch
      %121 = sbr.rel (0) target = $region13
    $region12: #{tpu_custom_call.1} parent=1 // pred_region
      %s123 = ssub.s32 2048, 2048
      %124 = vsyncadd [#allocation4], %s123
      %s125 = sshll.u32 [#allocation5], 4
      %s126 = int_to_ptr.vmem [resolvable:$true] %s125
      %131 = dma.vmem_to_hbm [thread:$0]  %s126, 2048, %s1, [#allocation4], 128, 128, 8
    $region13: #{tpu_custom_call.1} parent=1 // pred_fallthru
      _
    // Predicated region
    $region14: #{tpu_custom_call.1} parent=1 // pred_check
      _
    $region15: #{tpu_custom_call.1} parent=1 // pred_check_branch
      %133 = sbr.rel (0) target = $region17
    $region16: #{tpu_custom_call.1} parent=1 // pred_region
      %134 = dma.done [#allocation4], 2048
    $region17: #{tpu_custom_call.1} parent=1 // pred_fallthru
      _
    %135 = vsyncpa [#allocation3], 1
    %136 = vsyncpa [#allocation4], 1

</llo_original>
